<compile_context>
chip_gen: v5e
topology: v5e:2x2
jax: 0.10.0
libtpu: 0.0.40
codegen_flags: <defaults>
</compile_context>

<pallas_src>
import jax
import jax.numpy as jnp
from jax.experimental import pallas as pl
from jax.experimental.pallas import tpu as pltpu

BERT_DIM = 768
NUM_HID = 128
COMB_HID = 256
LANE = 128


def _round_up(x, m):
    return (x + m - 1) // m * m


def _choose_tiling(B, tm_max=512):
    """Pick (tile_rows, num_tiles, padded_batch) with bounded padding waste."""
    b8 = _round_up(B, 8)                      # sublane multiple (f32 activations)
    n = max(1, -(-b8 // tm_max))              # enough tiles to respect tm_max
    if b8 >= 32:                              # v7x: give both TensorCores work
        n = max(n, 2)
    if n == 1:
        tm = b8                               # single tile == full (padded) batch
    else:
        tm = _round_up(-(-b8 // n), 16)       # 16-row tiles: bf16-friendly packing
    return tm, n, n * tm


def classifier_head_kernel(bert_ref, num_ref,
                           w1_ref, b1_ref,
                           w2b_ref, w2n_ref, b2_ref,
                           w3_ref, b3_ref,
                           out_ref):
    # numeric branch: relu(numeric @ W1 + b1)
    # bf16 MXU inputs (cast in-kernel), f32 accumulation; bias/ReLU in f32.
    t = jnp.dot(num_ref[...].astype(jnp.bfloat16), w1_ref[...],
                preferred_element_type=jnp.float32)
    t = jnp.maximum(t + b1_ref[...], 0.0)

    # concat([bert, t], axis=1) @ W2  ==  bert @ W2_bert + t @ W2_num
    h = jnp.dot(bert_ref[...].astype(jnp.bfloat16), w2b_ref[...],
                preferred_element_type=jnp.float32)
    h = h + jnp.dot(t.astype(jnp.bfloat16), w2n_ref[...],
                    preferred_element_type=jnp.float32)
    h = jnp.maximum(h + b2_ref[...], 0.0)

    # output layer (no activation); classes lane-padded to a multiple of 128.
    logits = jnp.dot(h.astype(jnp.bfloat16), w3_ref[...],
                     preferred_element_type=jnp.float32) + b3_ref[...]
    out_ref[...] = logits.astype(out_ref.dtype)   # bf16 writeback


def text_classifier_head(bert_pooled, numeric, params, *, tm_max=512):
    """Fused Pallas kernel for the TextClassifierModel head.

    bert_pooled: [B, 768] (stand-in for BERT pooler_output; f32 or bf16)
    numeric:     [B, F]
    params: dict with w1 [F,128], b1 [1,128], w2_bert [768,256], w2_num [128,256],
            b2 [1,256], w3 [256,C], b3 [1,C]
    returns:     [B, C] float32 logits
    """
    B = bert_pooled.shape[0]
    F = numeric.shape[1]
    C = params["w3"].shape[1]
    C_pad = _round_up(C, LANE)

    tm, n_tiles, B_pad = _choose_tiling(B, tm_max)

    # Pad rows only when needed; never re-materialize the activations otherwise.
    if B_pad != B:
        bert_in = jnp.pad(bert_pooled, ((0, B_pad - B), (0, 0)))
        num_in = jnp.pad(numeric, ((0, B_pad - B), (0, 0)))
    else:
        bert_in, num_in = bert_pooled, numeric

    # Weights bf16, biases f32; output weights/bias lane-padded to C_pad.
    w1 = params["w1"].astype(jnp.bfloat16)
    b1 = params["b1"].astype(jnp.float32)
    w2b = params["w2_bert"].astype(jnp.bfloat16)
    w2n = params["w2_num"].astype(jnp.bfloat16)
    b2 = params["b2"].astype(jnp.float32)
    if C_pad != C:
        w3 = jnp.zeros((COMB_HID, C_pad), jnp.bfloat16).at[:, :C].set(
            params["w3"].astype(jnp.bfloat16))
        b3 = jnp.zeros((1, C_pad), jnp.float32).at[:, :C].set(
            params["b3"].astype(jnp.float32))
    else:
        w3 = params["w3"].astype(jnp.bfloat16)
        b3 = params["b3"].astype(jnp.float32)

    def batch_map(i):          # activation / output tiles walk the batch
        return (i, 0)

    def const_map(i):          # weights & biases stay VMEM-resident
        return (0, 0)

    in_specs = [
        pl.BlockSpec((tm, BERT_DIM), batch_map),
        pl.BlockSpec((tm, F), batch_map),
        pl.BlockSpec(w1.shape, const_map),
        pl.BlockSpec(b1.shape, const_map),
        pl.BlockSpec(w2b.shape, const_map),
        pl.BlockSpec(w2n.shape, const_map),
        pl.BlockSpec(b2.shape, const_map),
        pl.BlockSpec(w3.shape, const_map),
        pl.BlockSpec(b3.shape, const_map),
    ]
    out_spec = pl.BlockSpec((tm, C_pad), batch_map)

    flops = 2 * B_pad * (F * NUM_HID + BERT_DIM * COMB_HID
                         + NUM_HID * COMB_HID + COMB_HID * C_pad)
    bytes_accessed = (bert_in.size * bert_in.dtype.itemsize
                      + num_in.size * num_in.dtype.itemsize
                      + (w1.size + w2b.size + w2n.size + w3.size) * 2
                      + (b1.size + b2.size + b3.size) * 4
                      + B_pad * C_pad * 2)          # bf16 logits writeback

    out = pl.pallas_call(
        classifier_head_kernel,
        out_shape=jax.ShapeDtypeStruct((B_pad, C_pad), jnp.bfloat16),
        grid=(n_tiles,),
        in_specs=in_specs,
        out_specs=out_spec,
        compiler_params=pltpu.CompilerParams(
            dimension_semantics=("parallel",)),      # batch shards over v7x's 2 TCs
        cost_estimate=pl.CostEstimate(
            flops=flops, transcendentals=0, bytes_accessed=bytes_accessed),
    )(bert_in, num_in, w1, b1, w2b, w2n, b2, w3, b3)

    return out[:B, :C].astype(jnp.float32)


def init_params(key, num_numeric_features, num_classes):
    ks = jax.random.split(key, 7)
    scale = 0.02
    return {
        "w1": (scale * jax.random.normal(ks[0], (num_numeric_features, NUM_HID))
               ).astype(jnp.bfloat16),
        "b1": scale * jax.random.normal(ks[1], (1, NUM_HID), jnp.float32),
        "w2_bert": (scale * jax.random.normal(ks[2], (BERT_DIM, COMB_HID))
                    ).astype(jnp.bfloat16),
        "w2_num": (scale * jax.random.normal(ks[3], (NUM_HID, COMB_HID))
                   ).astype(jnp.bfloat16),
        "b2": scale * jax.random.normal(ks[4], (1, COMB_HID), jnp.float32),
        "w3": (scale * jax.random.normal(ks[5], (COMB_HID, num_classes))
               ).astype(jnp.bfloat16),
        "b3": scale * jax.random.normal(ks[6], (1, num_classes), jnp.float32),
    }


def reference_head(bert_pooled, numeric, p):
    # Pure-JAX f32 reference using the same (bf16-valued) weights.
    t = jnp.maximum(numeric @ p["w1"].astype(jnp.float32) + p["b1"], 0.0)
    combined = jnp.concatenate([bert_pooled, t], axis=1)
    w2 = jnp.concatenate([p["w2_bert"], p["w2_num"]], axis=0).astype(jnp.float32)
    h = jnp.maximum(combined @ w2 + p["b2"], 0.0)
    return h @ p["w3"].astype(jnp.float32) + p["b3"]


if __name__ == "__main__":
    B = 8                     # batch
    NUM_NUMERIC = 16          # num_numeric_features
    NUM_CLASSES = 8           # num_classes

    key = jax.random.PRNGKey(0)
    k_bert, k_num, k_par = jax.random.split(key, 3)

    # Stand-in for self.bert(**text).pooler_output  -> [B, 768]
    bert_pooled = jax.random.normal(k_bert, (B, BERT_DIM), jnp.float32)
    numeric = jax.random.normal(k_num, (B, NUM_NUMERIC), jnp.float32)
    params = init_params(k_par, NUM_NUMERIC, NUM_CLASSES)

    out = jax.block_until_ready(text_classifier_head(bert_pooled, numeric, params))
    ref = reference_head(bert_pooled, numeric, params)

    assert out.shape == (B, NUM_CLASSES)
    assert jnp.allclose(out, ref, atol=5e-2, rtol=5e-2)

    print("KERNEL_OK")
</pallas_src>

<mosaic_0001>
module attributes {stable_mosaic.version = 11 : i64} {
  func.func @classifier_head_kernel(%arg0: i32, %arg1: memref<8x768xf32, #tpu.memory_space<vmem>>, %arg2: memref<8x16xf32, #tpu.memory_space<vmem>>, %arg3: memref<16x128xbf16, #tpu.memory_space<vmem>>, %arg4: memref<1x128xf32, #tpu.memory_space<vmem>>, %arg5: memref<768x256xbf16, #tpu.memory_space<vmem>>, %arg6: memref<128x256xbf16, #tpu.memory_space<vmem>>, %arg7: memref<1x256xf32, #tpu.memory_space<vmem>>, %arg8: memref<256x128xbf16, #tpu.memory_space<vmem>>, %arg9: memref<1x128xf32, #tpu.memory_space<vmem>>, %arg10: memref<8x128xbf16, #tpu.memory_space<vmem>>) attributes {dimension_semantics = [#tpu.dimension_semantics<parallel>], iteration_bounds = array<i64: 1>, scalar_prefetch = 0 : i64, scratch_operands = 0 : i64, tpu.core_type = #tpu.core_type<tc>, window_params = [{transform_indices = @transform_0, window_bounds = array<i64: 8, 768>}, {transform_indices = @transform_1, window_bounds = array<i64: 8, 16>}, {pipeline_mode = #tpu.pipeline_mode<synchronous>, transform_indices = @transform_2, window_bounds = array<i64: 16, 128>}, {pipeline_mode = #tpu.pipeline_mode<synchronous>, transform_indices = @transform_3, window_bounds = array<i64: 1, 128>}, {pipeline_mode = #tpu.pipeline_mode<synchronous>, transform_indices = @transform_4, window_bounds = array<i64: 768, 256>}, {pipeline_mode = #tpu.pipeline_mode<synchronous>, transform_indices = @transform_5, window_bounds = array<i64: 128, 256>}, {pipeline_mode = #tpu.pipeline_mode<synchronous>, transform_indices = @transform_6, window_bounds = array<i64: 1, 256>}, {pipeline_mode = #tpu.pipeline_mode<synchronous>, transform_indices = @transform_7, window_bounds = array<i64: 256, 128>}, {pipeline_mode = #tpu.pipeline_mode<synchronous>, transform_indices = @transform_8, window_bounds = array<i64: 1, 128>}, {transform_indices = @transform_9, window_bounds = array<i64: 8, 128>}]} {
    %c0 = arith.constant 0 : index
    %c0_0 = arith.constant 0 : index
    %0 = vector.load %arg2[%c0, %c0_0] : memref<8x16xf32, #tpu.memory_space<vmem>>, vector<8x16xf32>
    %1 = arith.truncf %0 : vector<8x16xf32> to vector<8x16xbf16>
    %c0_1 = arith.constant 0 : index
    %c0_2 = arith.constant 0 : index
    %2 = vector.load %arg3[%c0_1, %c0_2] : memref<16x128xbf16, #tpu.memory_space<vmem>>, vector<16x128xbf16>
    %cst = arith.constant dense<0.000000e+00> : vector<8x128xf32>
    %3 = tpu.matmul %1, %2, %cst {dimension_numbers = #tpu.dot_dimension_numbers<[1], [0], [0], [1], [0, 0, 1, 1], [], []>} : vector<8x16xbf16>, vector<16x128xbf16>, vector<8x128xf32> -> vector<8x128xf32>
    %c0_3 = arith.constant 0 : index
    %c0_4 = arith.constant 0 : index
    %4 = vector.load %arg4[%c0_3, %c0_4] : memref<1x128xf32, #tpu.memory_space<vmem>>, vector<1x128xf32>
    %5 = vector.broadcast %4 : vector<1x128xf32> to vector<8x128xf32>
    %6 = arith.addf %3, %5 : vector<8x128xf32>
    %cst_5 = arith.constant 0.000000e+00 : f32
    %7 = vector.broadcast %cst_5 : f32 to vector<8x128xf32>
    %8 = arith.maximumf %6, %7 : vector<8x128xf32>
    %c0_6 = arith.constant 0 : index
    %c0_7 = arith.constant 0 : index
    %9 = vector.load %arg1[%c0_6, %c0_7] : memref<8x768xf32, #tpu.memory_space<vmem>>, vector<8x768xf32>
    %10 = arith.truncf %9 : vector<8x768xf32> to vector<8x768xbf16>
    %c0_8 = arith.constant 0 : index
    %c0_9 = arith.constant 0 : index
    %11 = vector.load %arg5[%c0_8, %c0_9] : memref<768x256xbf16, #tpu.memory_space<vmem>>, vector<768x256xbf16>
    %cst_10 = arith.constant dense<0.000000e+00> : vector<8x256xf32>
    %12 = tpu.matmul %10, %11, %cst_10 {dimension_numbers = #tpu.dot_dimension_numbers<[1], [0], [0], [1], [0, 0, 1, 1], [], []>} : vector<8x768xbf16>, vector<768x256xbf16>, vector<8x256xf32> -> vector<8x256xf32>
    %13 = arith.truncf %8 : vector<8x128xf32> to vector<8x128xbf16>
    %c0_11 = arith.constant 0 : index
    %c0_12 = arith.constant 0 : index
    %14 = vector.load %arg6[%c0_11, %c0_12] : memref<128x256xbf16, #tpu.memory_space<vmem>>, vector<128x256xbf16>
    %cst_13 = arith.constant dense<0.000000e+00> : vector<8x256xf32>
    %15 = tpu.matmul %13, %14, %cst_13 {dimension_numbers = #tpu.dot_dimension_numbers<[1], [0], [0], [1], [0, 0, 1, 1], [], []>} : vector<8x128xbf16>, vector<128x256xbf16>, vector<8x256xf32> -> vector<8x256xf32>
    %16 = arith.addf %12, %15 : vector<8x256xf32>
    %c0_14 = arith.constant 0 : index
    %c0_15 = arith.constant 0 : index
    %17 = vector.load %arg7[%c0_14, %c0_15] : memref<1x256xf32, #tpu.memory_space<vmem>>, vector<1x256xf32>
    %18 = vector.broadcast %17 : vector<1x256xf32> to vector<8x256xf32>
    %19 = arith.addf %16, %18 : vector<8x256xf32>
    %cst_16 = arith.constant 0.000000e+00 : f32
    %20 = vector.broadcast %cst_16 : f32 to vector<8x256xf32>
    %21 = arith.maximumf %19, %20 : vector<8x256xf32>
    %22 = arith.truncf %21 : vector<8x256xf32> to vector<8x256xbf16>
    %c0_17 = arith.constant 0 : index
    %c0_18 = arith.constant 0 : index
    %23 = vector.load %arg8[%c0_17, %c0_18] : memref<256x128xbf16, #tpu.memory_space<vmem>>, vector<256x128xbf16>
    %cst_19 = arith.constant dense<0.000000e+00> : vector<8x128xf32>
    %24 = tpu.matmul %22, %23, %cst_19 {dimension_numbers = #tpu.dot_dimension_numbers<[1], [0], [0], [1], [0, 0, 1, 1], [], []>} : vector<8x256xbf16>, vector<256x128xbf16>, vector<8x128xf32> -> vector<8x128xf32>
    %c0_20 = arith.constant 0 : index
    %c0_21 = arith.constant 0 : index
    %25 = vector.load %arg9[%c0_20, %c0_21] : memref<1x128xf32, #tpu.memory_space<vmem>>, vector<1x128xf32>
    %26 = vector.broadcast %25 : vector<1x128xf32> to vector<8x128xf32>
    %27 = arith.addf %24, %26 : vector<8x128xf32>
    %28 = arith.truncf %27 : vector<8x128xf32> to vector<8x128xbf16>
    %c0_22 = arith.constant 0 : index
    %c0_23 = arith.constant 0 : index
    %29 = vector.load %arg10[%c0_22, %c0_23] : memref<8x128xbf16, #tpu.memory_space<vmem>>, vector<8x128xbf16>
    tpu.vector_store %arg10[%c0_22, %c0_23], %28 {strides = array<i32>} : memref<8x128xbf16, #tpu.memory_space<vmem>>, vector<8x128xbf16>,
    return
  }
  func.func @transform_0(%arg0: i32) -> (i32, i32) {
    %c0_i32 = arith.constant 0 : i32
    %c0_i32_0 = arith.constant 0 : i32
    return %arg0, %c0_i32 : i32, i32
  }
  func.func @transform_1(%arg0: i32) -> (i32, i32) {
    %c0_i32 = arith.constant 0 : i32
    %c0_i32_0 = arith.constant 0 : i32
    return %arg0, %c0_i32 : i32, i32
  }
  func.func @transform_2(%arg0: i32) -> (i32, i32) {
    %c0_i32 = arith.constant 0 : i32
    %c0_i32_0 = arith.constant 0 : i32
    %c0_i32_1 = arith.constant 0 : i32
    return %c0_i32, %c0_i32_0 : i32, i32
  }
  func.func @transform_3(%arg0: i32) -> (i32, i32) {
    %c0_i32 = arith.constant 0 : i32
    %c0_i32_0 = arith.constant 0 : i32
    %c0_i32_1 = arith.constant 0 : i32
    return %c0_i32, %c0_i32_0 : i32, i32
  }
  func.func @transform_4(%arg0: i32) -> (i32, i32) {
    %c0_i32 = arith.constant 0 : i32
    %c0_i32_0 = arith.constant 0 : i32
    %c0_i32_1 = arith.constant 0 : i32
    return %c0_i32, %c0_i32_0 : i32, i32
  }
  func.func @transform_5(%arg0: i32) -> (i32, i32) {
    %c0_i32 = arith.constant 0 : i32
    %c0_i32_0 = arith.constant 0 : i32
    %c0_i32_1 = arith.constant 0 : i32
    return %c0_i32, %c0_i32_0 : i32, i32
  }
  func.func @transform_6(%arg0: i32) -> (i32, i32) {
    %c0_i32 = arith.constant 0 : i32
    %c0_i32_0 = arith.constant 0 : i32
    %c0_i32_1 = arith.constant 0 : i32
    return %c0_i32, %c0_i32_0 : i32, i32
  }
  func.func @transform_7(%arg0: i32) -> (i32, i32) {
    %c0_i32 = arith.constant 0 : i32
    %c0_i32_0 = arith.constant 0 : i32
    %c0_i32_1 = arith.constant 0 : i32
    return %c0_i32, %c0_i32_0 : i32, i32
  }
  func.func @transform_8(%arg0: i32) -> (i32, i32) {
    %c0_i32 = arith.constant 0 : i32
    %c0_i32_0 = arith.constant 0 : i32
    %c0_i32_1 = arith.constant 0 : i32
    return %c0_i32, %c0_i32_0 : i32, i32
  }
  func.func @transform_9(%arg0: i32) -> (i32, i32) {
    %c0_i32 = arith.constant 0 : i32
    %c0_i32_0 = arith.constant 0 : i32
    return %arg0, %c0_i32 : i32, i32
  }
}

</mosaic_0001>

<llo_original>
// kernel: tpu_custom_call.1
$region0: #{tpu_custom_call.1}
  #allocation0 [shape = 'u32[]', space=smem, size = 0x4, offset = 0x4, fixed_abs, tag = 'smem constant byte address 0x4 - core index']
  #allocation1 [shape = 'u32[72,128]{1,0:T(1,128)}', space=vmem, size = 0x9000, scoped, tag = 'internal scratch']
  %s0 = inlined_call_operand.hbm [shape: f32[8,768], index: 0, kind: input, shape index: {}]
  %s1 = inlined_call_operand.hbm [shape: f32[8,16], index: 1, kind: input, shape index: {}]
  %s2 = inlined_call_operand.hbm [shape: bf16[16,128], index: 2, kind: input, shape index: {}]
  %s3 = inlined_call_operand.vmem [shape: f32[1,128], index: 3, kind: input, shape index: {}]
  %s4 = inlined_call_operand.hbm [shape: bf16[768,256], index: 4, kind: input, shape index: {}]
  %s5 = inlined_call_operand.hbm [shape: bf16[128,256], index: 5, kind: input, shape index: {}]
  %s6 = inlined_call_operand.vmem [shape: f32[1,256], index: 6, kind: input, shape index: {}]
  %s7 = inlined_call_operand.hbm [shape: bf16[256,128], index: 7, kind: input, shape index: {}]
  %s8 = inlined_call_operand.vmem [shape: f32[1,128], index: 8, kind: input, shape index: {}]
  %s9 = inlined_call_operand.hbm [shape: bf16[8,128], index: 9, kind: output, shape index: {}]
  %s10 = sld [smem:[#allocation0]]
  $region70: #{tpu_custom_call.1} parent=0
    _
  %s12 = ssub.s32 1, %s10
  %s13 = scalar_select 0, %s12, %s10
  $region1: #{tpu_custom_call.1} parent=0
    #allocation2 [shape = 'u8[24576]{0}', space=vmem, size = 0x6000, scoped, tag = 'input window, operand 0, single buffered']
    #allocation3 [shape = 's32[1]{0}', space=sflag, size = 0x4, scoped, tag = 'scoped memory for tpu_custom_call.1']
    #allocation4 [shape = 's32[1]{0}', space=sflag, size = 0x4, scoped, tag = 'scoped memory for tpu_custom_call.1']
    #allocation5 [shape = 'u8[4096]{0}', space=vmem, size = 0x1000, scoped, tag = 'input window, operand 1, single buffered']
    #allocation6 [shape = 's32[1]{0}', space=sflag, size = 0x4, scoped, tag = 'scoped memory for tpu_custom_call.1']
    #allocation7 [shape = 'u8[4096]{0}', space=vmem, size = 0x1000, scoped, tag = 'input window, operand 2, single buffered']
    #allocation8 [shape = 'u8[393216]{0}', space=vmem, size = 0x60000, scoped, tag = 'input window, operand 4, single buffered']
    #allocation9 [shape = 's32[1]{0}', space=sflag, size = 0x4, scoped, tag = 'scoped memory for tpu_custom_call.1']
    #allocation10 [shape = 'u8[65536]{0}', space=vmem, size = 0x10000, scoped, tag = 'input window, operand 5, single buffered']
    #allocation11 [shape = 'u8[65536]{0}', space=vmem, size = 0x10000, scoped, tag = 'input window, operand 7, single buffered']
    #allocation12 [shape = 's32[1]{0}', space=sflag, size = 0x4, scoped, tag = 'scoped memory for tpu_custom_call.1']
    #allocation13 [shape = 'u8[2048]{0}', space=vmem, size = 0x800, scoped, tag = 'output window, operand 0, single buffered']
    %14 = vsyncpa [#allocation3], 0
    %15 = vsyncpa [#allocation6], 0
    %16 = vsyncpa [#allocation9], 0
    %17 = vsyncpa [#allocation12], 0
    %18 = vsyncpa [#allocation4], 0
    // Predicated region
    $region2: #{tpu_custom_call.1} parent=1 // pred_check
      _
    $region3: #{tpu_custom_call.1} parent=1 // pred_check_branch
      %20 = sbr.rel (0) target = $region5
    $region4: #{tpu_custom_call.1} parent=1 // pred_region
      %22 = vsyncadd [#allocation3], 0
      %s24 = sshll.u32 %s0, 4
      %s25 = int_to_ptr.hbm [resolvable:$true] %s24
      %s26 = sshll.u32 [#allocation2], 4
      %s27 = int_to_ptr.vmem [resolvable:$true] %s26
      %29 = dma.hbm_to_vmem [thread:$0]  %s25, 768, %s27, [#allocation3]
    $region5: #{tpu_custom_call.1} parent=1 // pred_fallthru
      _
    // Predicated region
    $region6: #{tpu_custom_call.1} parent=1 // pred_check
      _
    $region7: #{tpu_custom_call.1} parent=1 // pred_check_branch
      %31 = sbr.rel (0) target = $region9
    $region8: #{tpu_custom_call.1} parent=1 // pred_region
      %33 = vsyncadd [#allocation6], 0
      %s35 = sshll.u32 %s1, 4
      %s36 = int_to_ptr.hbm [resolvable:$true] %s35
      %s37 = sshll.u32 [#allocation5], 4
      %s38 = int_to_ptr.vmem [resolvable:$true] %s37
      %40 = dma.hbm_to_vmem [thread:$0]  %s36, 128, %s38, [#allocation6]
    $region9: #{tpu_custom_call.1} parent=1 // pred_fallthru
      _
    // Predicated region
    $region10: #{tpu_custom_call.1} parent=1 // pred_check
      _
    $region11: #{tpu_custom_call.1} parent=1 // pred_check_branch
      %42 = sbr.rel (0) target = $region13
    $region12: #{tpu_custom_call.1} parent=1 // pred_region
      %44 = vsyncadd [#allocation6], 0
      %s45 = sshll.u32 %s2, 4
      %s46 = int_to_ptr.hbm [resolvable:$true] %s45
      %s47 = sshll.u32 [#allocation7], 4
      %s48 = int_to_ptr.vmem [resolvable:$true] %s47
      %53 = dma.hbm_to_vmem [thread:$0]  %s46, 128, %s48, [#allocation6], 64, 64, 4
    $region13: #{tpu_custom_call.1} parent=1 // pred_fallthru
      _
    // Predicated region
    $region14: #{tpu_custom_call.1} parent=1 // pred_check
      _
    $region15: #{tpu_custom_call.1} parent=1 // pred_check_branch
      %55 = sbr.rel (0) target = $region17
    $region16: #{tpu_custom_call.1} parent=1 // pred_region
      _
    $region17: #{tpu_custom_call.1} parent=1 // pred_fallthru
      _
    // Predicated region
    $region18: #{tpu_custom_call.1} parent=1 // pred_check
      _
    $region19: #{tpu_custom_call.1} parent=1 // pred_check_branch
      %57 = sbr.rel (0) target = $region21
    $region20: #{tpu_custom_call.1} parent=1 // pred_region
      %59 = vsyncadd [#allocation9], 0
      %s60 = sshll.u32 %s4, 4
      %s61 = int_to_ptr.hbm [resolvable:$true] %s60
      %s62 = sshll.u32 [#allocation8], 4
      %s63 = int_to_ptr.vmem [resolvable:$true] %s62
      %68 = dma.hbm_to_vmem [thread:$0]  %s61, 12288, %s63, [#allocation9], 128, 128, 8
    $region21: #{tpu_custom_call.1} parent=1 // pred_fallthru
      _
    // Predicated region
    $region22: #{tpu_custom_call.1} parent=1 // pred_check
      _
    $region23: #{tpu_custom_call.1} parent=1 // pred_check_branch
      %70 = sbr.rel (0) target = $region25
    $region24: #{tpu_custom_call.1} parent=1 // pred_region
      %72 = vsyncadd [#allocation9], 0
      %s73 = sshll.u32 %s5, 4
      %s74 = int_to_ptr.hbm [resolvable:$true] %s73
      %s75 = sshll.u32 [#allocation10], 4
      %s76 = int_to_ptr.vmem [resolvable:$true] %s75
      %81 = dma.hbm_to_vmem [thread:$0]  %s74, 2048, %s76, [#allocation9], 128, 128, 8
    $region25: #{tpu_custom_call.1} parent=1 // pred_fallthru
      _
    // Predicated region
    $region26: #{tpu_custom_call.1} parent=1 // pred_check
      _
    $region27: #{tpu_custom_call.1} parent=1 // pred_check_branch
      %83 = sbr.rel (0) target = $region29
    $region28: #{tpu_custom_call.1} parent=1 // pred_region
      _
    $region29: #{tpu_custom_call.1} parent=1 // pred_fallthru
      _
    // Predicated region
    $region30: #{tpu_custom_call.1} parent=1 // pred_check
      _
    $region31: #{tpu_custom_call.1} parent=1 // pred_check_branch
      %85 = sbr.rel (0) target = $region33
    $region32: #{tpu_custom_call.1} parent=1 // pred_region
      %87 = vsyncadd [#allocation12], 0
      %s88 = sshll.u32 %s7, 4
      %s89 = int_to_ptr.hbm [resolvable:$true] %s88
      %s90 = sshll.u32 [#allocation11], 4
      %s91 = int_to_ptr.vmem [resolvable:$true] %s90
      %96 = dma.hbm_to_vmem [thread:$0]  %s89, 2048, %s91, [#allocation12], 64, 64, 4
    $region33: #{tpu_custom_call.1} parent=1 // pred_fallthru
      _
    // Predicated region
    $region34: #{tpu_custom_call.1} parent=1 // pred_check
      _
    $region35: #{tpu_custom_call.1} parent=1 // pred_check_branch
      %98 = sbr.rel (0) target = $region37
    $region36: #{tpu_custom_call.1} parent=1 // pred_region
      _
    $region37: #{tpu_custom_call.1} parent=1 // pred_fallthru
      _
    // Predicated region
    $region38: #{tpu_custom_call.1} parent=1 // pred_check
      _
    $region39: #{tpu_custom_call.1} parent=1 // pred_check_branch
      %100 = sbr.rel (0) target = $region41
    $region40: #{tpu_custom_call.1} parent=1 // pred_region
      %102 = dma.done [#allocation3], 768
    $region41: #{tpu_custom_call.1} parent=1 // pred_fallthru
      _
    // Predicated region
    $region42: #{tpu_custom_call.1} parent=1 // pred_check
      _
    $region43: #{tpu_custom_call.1} parent=1 // pred_check_branch
      %104 = sbr.rel (0) target = $region45
    $region44: #{tpu_custom_call.1} parent=1 // pred_region
      %106 = dma.done [#allocation6], 128
    $region45: #{tpu_custom_call.1} parent=1 // pred_fallthru
      _
    // Predicated region
    $region46: #{tpu_custom_call.1} parent=1 // pred_check
      _
    $region47: #{tpu_custom_call.1} parent=1 // pred_check_branch
      %108 = sbr.rel (0) target = $region49
    $region48: #{tpu_custom_call.1} parent=1 // pred_region
      %110 = dma.done [#allocation6], 128
    $region49: #{tpu_custom_call.1} parent=1 // pred_fallthru
      _
    // Predicated region
    $region50: #{tpu_custom_call.1} parent=1 // pred_check
      _
    $region51: #{tpu_custom_call.1} parent=1 // pred_check_branch
      %112 = sbr.rel (0) target = $region53
    $region52: #{tpu_custom_call.1} parent=1 // pred_region
      %114 = dma.done [#allocation9], 12288
    $region53: #{tpu_custom_call.1} parent=1 // pred_fallthru
      _
    // Predicated region
    $region54: #{tpu_custom_call.1} parent=1 // pred_check
      _
    $region55: #{tpu_custom_call.1} parent=1 // pred_check_branch
      %116 = sbr.rel (0) target = $region57
    $region56: #{tpu_custom_call.1} parent=1 // pred_region
      %118 = dma.done [#allocation9], 2048
    $region57: #{tpu_custom_call.1} parent=1 // pred_fallthru
      _
    // Predicated region
    $region58: #{tpu_custom_call.1} parent=1 // pred_check
      _
    $region59: #{tpu_custom_call.1} parent=1 // pred_check_branch
      %120 = sbr.rel (0) target = $region61
    $region60: #{tpu_custom_call.1} parent=1 // pred_region
      %122 = dma.done [#allocation12], 2048
    $region61: #{tpu_custom_call.1} parent=1 // pred_fallthru
      _
    %v124 = vld [vmem:[#allocation5] sm:$0xff]
    %v125 = vpack.c.bf16 %v124, %v124
    %v126 = vld [vmem:[#allocation7] sm:$0xf]
    %v127 = vld [vmem:[#allocation7 + $0x4] sm:$0xf]
    %v128 = vld [vmem:[%s3] sm:$0x1]
    %v130 = vperm.slane %v128, 0
    %v134 = vunpack.c.l.b16 %v126
    %v135 = vunpack.c.l.b16 %v127
    %v136 = vpack.c.b16 %v135, %v134
    %vm138 = vcmask 130048
    %v140 = vsel %vm138, %v125, 0
    %142 = vmatpush.bf16.msra.mxu0 0
    %143 = vmatpush.bf16.msra.mxu0 0
    %144 = vmatpush.bf16.msra.mxu0 0
    %145 = vmatpush.bf16.msra.mxu0 0
    %146 = vmatpush.bf16.msra.mxu0 0
    %147 = vmatpush.bf16.msra.mxu0 0
    %148 = vmatpush.bf16.msra.mxu0 0
    %149 = vmatpush.bf16.msra.mxu0 %v136
    %150 = vmatmul.bf16.gmra.mxu0 %v140
    %v151 = vpop.f32.mrf.mxu0
    %v152 = vadd.f32 %v130, %v151
    %v153 = vpop.f32.mrf.mxu0
    %154 = vdwg.mxu0
    %v155 = vmax.f32 %v152, 0.0
    %v156 = vld [vmem:[#allocation2] sm:$0xff]
    %v157 = vld [vmem:[#allocation2 + $0x8] sm:$0xff]
    %v158 = vld [vmem:[#allocation2 + $0x10] sm:$0xff]
    %v159 = vld [vmem:[#allocation2 + $0x18] sm:$0xff]
    %v160 = vld [vmem:[#allocation2 + $0x20] sm:$0xff]
    %v161 = vld [vmem:[#allocation2 + $0x28] sm:$0xff]
    %v162 = vpack.c.bf16 %v156, %v156
    %v163 = vpack.c.bf16 %v157, %v157
    %v164 = vpack.c.bf16 %v158, %v158
    %v165 = vpack.c.bf16 %v159, %v159
    %v166 = vpack.c.bf16 %v160, %v160
    %v167 = vpack.c.bf16 %v161, %v161
    %v168 = vld [vmem:[#allocation8] sm:$0xff]
    %v169 = vld [vmem:[#allocation8 + $0x8] sm:$0xff]
    %v170 = vld [vmem:[#allocation8 + $0x10] sm:$0xff]
    %v171 = vld [vmem:[#allocation8 + $0x18] sm:$0xff]
    %v172 = vld [vmem:[#allocation8 + $0x20] sm:$0xff]
    %v173 = vld [vmem:[#allocation8 + $0x28] sm:$0xff]
    %v174 = vld [vmem:[#allocation8 + $0x30] sm:$0xff]
    %v175 = vld [vmem:[#allocation8 + $0x38] sm:$0xff]
    %v176 = vld [vmem:[#allocation8 + $0x40] sm:$0xff]
    %v177 = vld [vmem:[#allocation8 + $0x48] sm:$0xff]
    %v178 = vld [vmem:[#allocation8 + $0x50] sm:$0xff]
    %v179 = vld [vmem:[#allocation8 + $0x58] sm:$0xff]
    %v180 = vld [vmem:[#allocation8 + $0x60] sm:$0xff]
    %v181 = vld [vmem:[#allocation8 + $0x68] sm:$0xff]
    %v182 = vld [vmem:[#allocation8 + $0x70] sm:$0xff]
    %v183 = vld [vmem:[#allocation8 + $0x78] sm:$0xff]
    %v184 = vld [vmem:[#allocation8 + $0x80] sm:$0xff]
    %v185 = vld [vmem:[#allocation8 + $0x88] sm:$0xff]
    %v186 = vld [vmem:[#allocation8 + $0x90] sm:$0xff]
    %v187 = vld [vmem:[#allocation8 + $0x98] sm:$0xff]
    %v188 = vld [vmem:[#allocation8 + $0xa0] sm:$0xff]
    %v189 = vld [vmem:[#allocation8 + $0xa8] sm:$0xff]
    %v190 = vld [vmem:[#allocation8 + $0xb0] sm:$0xff]
    %v191 = vld [vmem:[#allocation8 + $0xb8] sm:$0xff]
    %v192 = vld [vmem:[#allocation8 + $0xc0] sm:$0xff]
    %v193 = vld [vmem:[#allocation8 + $0xc8] sm:$0xff]
    %v194 = vld [vmem:[#allocation8 + $0xd0] sm:$0xff]
    %v195 = vld [vmem:[#allocation8 + $0xd8] sm:$0xff]
    %v196 = vld [vmem:[#allocation8 + $0xe0] sm:$0xff]
    %v197 = vld [vmem:[#allocation8 + $0xe8] sm:$0xff]
    %v198 = vld [vmem:[#allocation8 + $0xf0] sm:$0xff]
    %v199 = vld [vmem:[#allocation8 + $0xf8] sm:$0xff]
    %v200 = vld [vmem:[#allocation8 + $0x100] sm:$0xff]
    %v201 = vld [vmem:[#allocation8 + $0x108] sm:$0xff]
    %v202 = vld [vmem:[#allocation8 + $0x110] sm:$0xff]
    %v203 = vld [vmem:[#allocation8 + $0x118] sm:$0xff]
    %v204 = vld [vmem:[#allocation8 + $0x120] sm:$0xff]
    %v205 = vld [vmem:[#allocation8 + $0x128] sm:$0xff]
    %v206 = vld [vmem:[#allocation8 + $0x130] sm:$0xff]
    %v207 = vld [vmem:[#allocation8 + $0x138] sm:$0xff]
    %v208 = vld [vmem:[#allocation8 + $0x140] sm:$0xff]
    %v209 = vld [vmem:[#allocation8 + $0x148] sm:$0xff]
    %v210 = vld [vmem:[#allocation8 + $0x150] sm:$0xff]
    %v211 = vld [vmem:[#allocation8 + $0x158] sm:$0xff]
    %v212 = vld [vmem:[#allocation8 + $0x160] sm:$0xff]
    %v213 = vld [vmem:[#allocation8 + $0x168] sm:$0xff]
    %v214 = vld [vmem:[#allocation8 + $0x170] sm:$0xff]
    %v215 = vld [vmem:[#allocation8 + $0x178] sm:$0xff]
    %v216 = vld [vmem:[#allocation8 + $0x180] sm:$0xff]
    %v217 = vld [vmem:[#allocation8 + $0x188] sm:$0xff]
    %v218 = vld [vmem:[#allocation8 + $0x190] sm:$0xff]
    %v219 = vld [vmem:[#allocation8 + $0x198] sm:$0xff]
    %v220 = vld [vmem:[#allocation8 + $0x1a0] sm:$0xff]
    %v221 = vld [vmem:[#allocation8 + $0x1a8] sm:$0xff]
    %v222 = vld [vmem:[#allocation8 + $0x1b0] sm:$0xff]
    %v223 = vld [vmem:[#allocation8 + $0x1b8] sm:$0xff]
    %v224 = vld [vmem:[#allocation8 + $0x1c0] sm:$0xff]
    %v225 = vld [vmem:[#allocation8 + $0x1c8] sm:$0xff]
    %v226 = vld [vmem:[#allocation8 + $0x1d0] sm:$0xff]
    %v227 = vld [vmem:[#allocation8 + $0x1d8] sm:$0xff]
    %v228 = vld [vmem:[#allocation8 + $0x1e0] sm:$0xff]
    %v229 = vld [vmem:[#allocation8 + $0x1e8] sm:$0xff]
    %v230 = vld [vmem:[#allocation8 + $0x1f0] sm:$0xff]
    %v231 = vld [vmem:[#allocation8 + $0x1f8] sm:$0xff]
    %v232 = vld [vmem:[#allocation8 + $0x200] sm:$0xff]
    %v233 = vld [vmem:[#allocation8 + $0x208] sm:$0xff]
    %v234 = vld [vmem:[#allocation8 + $0x210] sm:$0xff]
    %v235 = vld [vmem:[#allocation8 + $0x218] sm:$0xff]
    %v236 = vld [vmem:[#allocation8 + $0x220] sm:$0xff]
    %v237 = vld [vmem:[#allocation8 + $0x228] sm:$0xff]
    %v238 = vld [vmem:[#allocation8 + $0x230] sm:$0xff]
    %v239 = vld [vmem:[#allocation8 + $0x238] sm:$0xff]
    %v240 = vld [vmem:[#allocation8 + $0x240] sm:$0xff]
    %v241 = vld [vmem:[#allocation8 + $0x248] sm:$0xff]
    %v242 = vld [vmem:[#allocation8 + $0x250] sm:$0xff]
    %v243 = vld [vmem:[#allocation8 + $0x258] sm:$0xff]
    %v244 = vld [vmem:[#allocation8 + $0x260] sm:$0xff]
    %v245 = vld [vmem:[#allocation8 + $0x268] sm:$0xff]
    %v246 = vld [vmem:[#allocation8 + $0x270] sm:$0xff]
    %v247 = vld [vmem:[#allocation8 + $0x278] sm:$0xff]
    %v248 = vld [vmem:[#allocation8 + $0x280] sm:$0xff]
    %v249 = vld [vmem:[#allocation8 + $0x288] sm:$0xff]
    %v250 = vld [vmem:[#allocation8 + $0x290] sm:$0xff]
    %v251 = vld [vmem:[#allocation8 + $0x298] sm:$0xff]
    %v252 = vld [vmem:[#allocation8 + $0x2a0] sm:$0xff]
    %v253 = vld [vmem:[#allocation8 + $0x2a8] sm:$0xff]
    %v254 = vld [vmem:[#allocation8 + $0x2b0] sm:$0xff]
    %v255 = vld [vmem:[#allocation8 + $0x2b8] sm:$0xff]
    %v256 = vld [vmem:[#allocation8 + $0x2c0] sm:$0xff]
    %v257 = vld [vmem:[#allocation8 + $0x2c8] sm:$0xff]
    %v258 = vld [vmem:[#allocation8 + $0x2d0] sm:$0xff]
    %v259 = vld [vmem:[#allocation8 + $0x2d8] sm:$0xff]
    %v260 = vld [vmem:[#allocation8 + $0x2e0] sm:$0xff]
    %v261 = vld [vmem:[#allocation8 + $0x2e8] sm:$0xff]
    %v262 = vld [vmem:[#allocation8 + $0x2f0] sm:$0xff]
    %v263 = vld [vmem:[#allocation8 + $0x2f8] sm:$0xff]
    %v264 = vpack.c.bf16 %v155, %v155
    %v265 = vld [vmem:[#allocation10] sm:$0xff]
    %v266 = vld [vmem:[#allocation10 + $0x8] sm:$0xff]
    %v267 = vld [vmem:[#allocation10 + $0x10] sm:$0xff]
    %v268 = vld [vmem:[#allocation10 + $0x18] sm:$0xff]
    %v269 = vld [vmem:[#allocation10 + $0x20] sm:$0xff]
    %v270 = vld [vmem:[#allocation10 + $0x28] sm:$0xff]
    %v271 = vld [vmem:[#allocation10 + $0x30] sm:$0xff]
    %v272 = vld [vmem:[#allocation10 + $0x38] sm:$0xff]
    %v273 = vld [vmem:[#allocation10 + $0x40] sm:$0xff]
    %v274 = vld [vmem:[#allocation10 + $0x48] sm:$0xff]
    %v275 = vld [vmem:[#allocation10 + $0x50] sm:$0xff]
    %v276 = vld [vmem:[#allocation10 + $0x58] sm:$0xff]
    %v277 = vld [vmem:[#allocation10 + $0x60] sm:$0xff]
    %v278 = vld [vmem:[#allocation10 + $0x68] sm:$0xff]
    %v279 = vld [vmem:[#allocation10 + $0x70] sm:$0xff]
    %v280 = vld [vmem:[#allocation10 + $0x78] sm:$0xff]
    %v297 = vunpack.c.l.b16 %v265
    %v298 = vunpack.c.h.b16 %v265
    %v299 = vunpack.c.l.b16 %v266
    %v300 = vunpack.c.h.b16 %v266
    %v301 = vunpack.c.l.b16 %v267
    %v302 = vunpack.c.h.b16 %v267
    %v303 = vunpack.c.l.b16 %v268
    %v304 = vunpack.c.h.b16 %v268
    %v305 = vunpack.c.l.b16 %v269
    %v306 = vunpack.c.h.b16 %v269
    %v307 = vunpack.c.l.b16 %v270
    %v308 = vunpack.c.h.b16 %v270
    %v309 = vunpack.c.l.b16 %v271
    %v310 = vunpack.c.h.b16 %v271
    %v311 = vunpack.c.l.b16 %v272
    %v312 = vunpack.c.h.b16 %v272
    %v313 = vunpack.c.l.b16 %v273
    %v314 = vunpack.c.h.b16 %v273
    %v315 = vunpack.c.l.b16 %v274
    %v316 = vunpack.c.h.b16 %v274
    %v317 = vunpack.c.l.b16 %v275
    %v318 = vunpack.c.h.b16 %v275
    %v319 = vunpack.c.l.b16 %v276
    %v320 = vunpack.c.h.b16 %v276
    %v321 = vunpack.c.l.b16 %v277
    %v322 = vunpack.c.h.b16 %v277
    %v323 = vunpack.c.l.b16 %v278
    %v324 = vunpack.c.h.b16 %v278
    %v325 = vunpack.c.l.b16 %v279
    %v326 = vunpack.c.h.b16 %v279
    %v327 = vunpack.c.l.b16 %v280
    %v328 = vunpack.c.h.b16 %v280
    %v329 = vpack.c.b16 %v299, %v297
    %v330 = vpack.c.b16 %v300, %v298
    %v331 = vpack.c.b16 %v303, %v301
    %v332 = vpack.c.b16 %v304, %v302
    %v333 = vpack.c.b16 %v307, %v305
    %v334 = vpack.c.b16 %v308, %v306
    %v335 = vpack.c.b16 %v311, %v309
    %v336 = vpack.c.b16 %v312, %v310
    %v337 = vpack.c.b16 %v315, %v313
    %v338 = vpack.c.b16 %v316, %v314
    %v339 = vpack.c.b16 %v319, %v317
    %v340 = vpack.c.b16 %v320, %v318
    %v341 = vpack.c.b16 %v323, %v321
    %v342 = vpack.c.b16 %v324, %v322
    %v343 = vpack.c.b16 %v327, %v325
    %v344 = vpack.c.b16 %v328, %v326
    %361 = vmatpush.bf16.msra.mxu0 %v343
    %362 = vmatpush.bf16.msra.mxu0 %v341
    %363 = vmatpush.bf16.msra.mxu0 %v339
    %364 = vmatpush.bf16.msra.mxu0 %v337
    %365 = vmatpush.bf16.msra.mxu0 %v335
    %366 = vmatpush.bf16.msra.mxu0 %v333
    %367 = vmatpush.bf16.msra.mxu0 %v331
    %368 = vmatpush.bf16.msra.mxu0 %v329
    %369 = vmatmul.bf16.gmra.mxu0 %v264
    %v370 = vpop.f32.mrf.mxu0
    %v371 = vadd.f32 0.0, %v370
    %v372 = vpop.f32.mrf.mxu0
    %373 = vdwg.mxu0
    %374 = vmatpush.bf16.msra.mxu0 %v344
    %375 = vmatpush.bf16.msra.mxu0 %v342
    %376 = vmatpush.bf16.msra.mxu0 %v340
    %377 = vmatpush.bf16.msra.mxu0 %v338
    %378 = vmatpush.bf16.msra.mxu0 %v336
    %379 = vmatpush.bf16.msra.mxu0 %v334
    %380 = vmatpush.bf16.msra.mxu0 %v332
    %381 = vmatpush.bf16.msra.mxu0 %v330
    %382 = vmatmul.bf16.gmra.mxu0 %v264
    %v383 = vpop.f32.mrf.mxu0
    %v384 = vadd.f32 0.0, %v383
    %v385 = vpop.f32.mrf.mxu0
    %386 = vdwg.mxu0
    %v483 = vunpack.c.l.b16 %v168
    %v484 = vunpack.c.h.b16 %v168
    %v485 = vunpack.c.l.b16 %v169
    %v486 = vunpack.c.h.b16 %v169
    %v487 = vunpack.c.l.b16 %v170
    %v488 = vunpack.c.h.b16 %v170
    %v489 = vunpack.c.l.b16 %v171
    %v490 = vunpack.c.h.b16 %v171
    %v491 = vunpack.c.l.b16 %v172
    %v492 = vunpack.c.h.b16 %v172
    %v493 = vunpack.c.l.b16 %v173
    %v494 = vunpack.c.h.b16 %v173
    %v495 = vunpack.c.l.b16 %v174
    %v496 = vunpack.c.h.b16 %v174
    %v497 = vunpack.c.l.b16 %v175
    %v498 = vunpack.c.h.b16 %v175
    %v499 = vunpack.c.l.b16 %v176
    %v500 = vunpack.c.h.b16 %v176
    %v501 = vunpack.c.l.b16 %v177
    %v502 = vunpack.c.h.b16 %v177
    %v503 = vunpack.c.l.b16 %v178
    %v504 = vunpack.c.h.b16 %v178
    %v505 = vunpack.c.l.b16 %v179
    %v506 = vunpack.c.h.b16 %v179
    %v507 = vunpack.c.l.b16 %v180
    %v508 = vunpack.c.h.b16 %v180
    %v509 = vunpack.c.l.b16 %v181
    %v510 = vunpack.c.h.b16 %v181
    %v511 = vunpack.c.l.b16 %v182
    %v512 = vunpack.c.h.b16 %v182
    %v513 = vunpack.c.l.b16 %v183
    %v514 = vunpack.c.h.b16 %v183
    %v515 = vunpack.c.l.b16 %v184
    %v516 = vunpack.c.h.b16 %v184
    %v517 = vunpack.c.l.b16 %v185
    %v518 = vunpack.c.h.b16 %v185
    %v519 = vunpack.c.l.b16 %v186
    %v520 = vunpack.c.h.b16 %v186
    %v521 = vunpack.c.l.b16 %v187
    %v522 = vunpack.c.h.b16 %v187
    %v523 = vunpack.c.l.b16 %v188
    %v524 = vunpack.c.h.b16 %v188
    %v525 = vunpack.c.l.b16 %v189
    %v526 = vunpack.c.h.b16 %v189
    %v527 = vunpack.c.l.b16 %v190
    %v528 = vunpack.c.h.b16 %v190
    %v529 = vunpack.c.l.b16 %v191
    %v530 = vunpack.c.h.b16 %v191
    %v531 = vunpack.c.l.b16 %v192
    %v532 = vunpack.c.h.b16 %v192
    %v533 = vunpack.c.l.b16 %v193
    %v534 = vunpack.c.h.b16 %v193
    %v535 = vunpack.c.l.b16 %v194
    %v536 = vunpack.c.h.b16 %v194
    %v537 = vunpack.c.l.b16 %v195
    %v538 = vunpack.c.h.b16 %v195
    %v539 = vunpack.c.l.b16 %v196
    %v540 = vunpack.c.h.b16 %v196
    %v541 = vunpack.c.l.b16 %v197
    %v542 = vunpack.c.h.b16 %v197
    %v543 = vunpack.c.l.b16 %v198
    %v544 = vunpack.c.h.b16 %v198
    %v545 = vunpack.c.l.b16 %v199
    %v546 = vunpack.c.h.b16 %v199
    %v547 = vunpack.c.l.b16 %v200
    %v548 = vunpack.c.h.b16 %v200
    %v549 = vunpack.c.l.b16 %v201
    %v550 = vunpack.c.h.b16 %v201
    %v551 = vunpack.c.l.b16 %v202
    %v552 = vunpack.c.h.b16 %v202
    %v553 = vunpack.c.l.b16 %v203
    %v554 = vunpack.c.h.b16 %v203
    %v555 = vunpack.c.l.b16 %v204
    %v556 = vunpack.c.h.b16 %v204
    %v557 = vunpack.c.l.b16 %v205
    %v558 = vunpack.c.h.b16 %v205
    %v559 = vunpack.c.l.b16 %v206
    %v560 = vunpack.c.h.b16 %v206
    %v561 = vunpack.c.l.b16 %v207
    %v562 = vunpack.c.h.b16 %v207
    %v563 = vunpack.c.l.b16 %v208
    %v564 = vunpack.c.h.b16 %v208
    %v565 = vunpack.c.l.b16 %v209
    %v566 = vunpack.c.h.b16 %v209
    %v567 = vunpack.c.l.b16 %v210
    %v568 = vunpack.c.h.b16 %v210
    %v569 = vunpack.c.l.b16 %v211
    %v570 = vunpack.c.h.b16 %v211
    %v571 = vunpack.c.l.b16 %v212
    %v572 = vunpack.c.h.b16 %v212
    %v573 = vunpack.c.l.b16 %v213
    %v574 = vunpack.c.h.b16 %v213
    %v575 = vunpack.c.l.b16 %v214
    %v576 = vunpack.c.h.b16 %v214
    %v577 = vunpack.c.l.b16 %v215
    %v578 = vunpack.c.h.b16 %v215
    %v579 = vunpack.c.l.b16 %v216
    %v580 = vunpack.c.h.b16 %v216
    %v581 = vunpack.c.l.b16 %v217
    %v582 = vunpack.c.h.b16 %v217
    %v583 = vunpack.c.l.b16 %v218
    %v584 = vunpack.c.h.b16 %v218
    %v585 = vunpack.c.l.b16 %v219
    %v586 = vunpack.c.h.b16 %v219
    %v587 = vunpack.c.l.b16 %v220
    %v588 = vunpack.c.h.b16 %v220
    %v589 = vunpack.c.l.b16 %v221
    %v590 = vunpack.c.h.b16 %v221
    %v591 = vunpack.c.l.b16 %v222
    %v592 = vunpack.c.h.b16 %v222
    %v593 = vunpack.c.l.b16 %v223
    %v594 = vunpack.c.h.b16 %v223
    %v595 = vunpack.c.l.b16 %v224
    %v596 = vunpack.c.h.b16 %v224
    %v597 = vunpack.c.l.b16 %v225
    %v598 = vunpack.c.h.b16 %v225
    %v599 = vunpack.c.l.b16 %v226
    %v600 = vunpack.c.h.b16 %v226
    %v601 = vunpack.c.l.b16 %v227
    %v602 = vunpack.c.h.b16 %v227
    %v603 = vunpack.c.l.b16 %v228
    %v604 = vunpack.c.h.b16 %v228
    %v605 = vunpack.c.l.b16 %v229
    %v606 = vunpack.c.h.b16 %v229
    %v607 = vunpack.c.l.b16 %v230
    %v608 = vunpack.c.h.b16 %v230
    %v609 = vunpack.c.l.b16 %v231
    %v610 = vunpack.c.h.b16 %v231
    %v611 = vunpack.c.l.b16 %v232
    %v612 = vunpack.c.h.b16 %v232
    %v613 = vunpack.c.l.b16 %v233
    %v614 = vunpack.c.h.b16 %v233
    %v615 = vunpack.c.l.b16 %v234
    %v616 = vunpack.c.h.b16 %v234
    %v617 = vunpack.c.l.b16 %v235
    %v618 = vunpack.c.h.b16 %v235
    %v619 = vunpack.c.l.b16 %v236
    %v620 = vunpack.c.h.b16 %v236
    %v621 = vunpack.c.l.b16 %v237
    %v622 = vunpack.c.h.b16 %v237
    %v623 = vunpack.c.l.b16 %v238
    %v624 = vunpack.c.h.b16 %v238
    %v625 = vunpack.c.l.b16 %v239
    %v626 = vunpack.c.h.b16 %v239
    %v627 = vunpack.c.l.b16 %v240
    %v628 = vunpack.c.h.b16 %v240
    %v629 = vunpack.c.l.b16 %v241
    %v630 = vunpack.c.h.b16 %v241
    %v631 = vunpack.c.l.b16 %v242
    %v632 = vunpack.c.h.b16 %v242
    %v633 = vunpack.c.l.b16 %v243
    %v634 = vunpack.c.h.b16 %v243
    %v635 = vunpack.c.l.b16 %v244
    %v636 = vunpack.c.h.b16 %v244
    %v637 = vunpack.c.l.b16 %v245
    %v638 = vunpack.c.h.b16 %v245
    %v639 = vunpack.c.l.b16 %v246
    %v640 = vunpack.c.h.b16 %v246
    %v641 = vunpack.c.l.b16 %v247
    %v642 = vunpack.c.h.b16 %v247
    %v643 = vunpack.c.l.b16 %v248
    %v644 = vunpack.c.h.b16 %v248
    %v645 = vunpack.c.l.b16 %v249
    %v646 = vunpack.c.h.b16 %v249
    %v647 = vunpack.c.l.b16 %v250
    %v648 = vunpack.c.h.b16 %v250
    %v649 = vunpack.c.l.b16 %v251
    %v650 = vunpack.c.h.b16 %v251
    %v651 = vunpack.c.l.b16 %v252
    %v652 = vunpack.c.h.b16 %v252
    %v653 = vunpack.c.l.b16 %v253
    %v654 = vunpack.c.h.b16 %v253
    %v655 = vunpack.c.l.b16 %v254
    %v656 = vunpack.c.h.b16 %v254
    %v657 = vunpack.c.l.b16 %v255
    %v658 = vunpack.c.h.b16 %v255
    %v659 = vunpack.c.l.b16 %v256
    %v660 = vunpack.c.h.b16 %v256
    %v661 = vunpack.c.l.b16 %v257
    %v662 = vunpack.c.h.b16 %v257
    %v663 = vunpack.c.l.b16 %v258
    %v664 = vunpack.c.h.b16 %v258
    %v665 = vunpack.c.l.b16 %v259
    %v666 = vunpack.c.h.b16 %v259
    %v667 = vunpack.c.l.b16 %v260
    %v668 = vunpack.c.h.b16 %v260
    %v669 = vunpack.c.l.b16 %v261
    %v670 = vunpack.c.h.b16 %v261
    %v671 = vunpack.c.l.b16 %v262
    %v672 = vunpack.c.h.b16 %v262
    %v673 = vunpack.c.l.b16 %v263
    %v674 = vunpack.c.h.b16 %v263
    %v675 = vpack.c.b16 %v485, %v483
    %v676 = vpack.c.b16 %v486, %v484
    %v677 = vpack.c.b16 %v489, %v487
    %v678 = vpack.c.b16 %v490, %v488
    %v679 = vpack.c.b16 %v493, %v491
    %v680 = vpack.c.b16 %v494, %v492
    %v681 = vpack.c.b16 %v497, %v495
    %v682 = vpack.c.b16 %v498, %v496
    %v683 = vpack.c.b16 %v501, %v499
    %v684 = vpack.c.b16 %v502, %v500
    %v685 = vpack.c.b16 %v505, %v503
    %v686 = vpack.c.b16 %v506, %v504
    %v687 = vpack.c.b16 %v509, %v507
    %v688 = vpack.c.b16 %v510, %v508
    %v689 = vpack.c.b16 %v513, %v511
    %v690 = vpack.c.b16 %v514, %v512
    %v691 = vpack.c.b16 %v517, %v515
    %v692 = vpack.c.b16 %v518, %v516
    %v693 = vpack.c.b16 %v521, %v519
    %v694 = vpack.c.b16 %v522, %v520
    %v695 = vpack.c.b16 %v525, %v523
    %v696 = vpack.c.b16 %v526, %v524
    %v697 = vpack.c.b16 %v529, %v527
    %v698 = vpack.c.b16 %v530, %v528
    %v699 = vpack.c.b16 %v533, %v531
    %v700 = vpack.c.b16 %v534, %v532
    %v701 = vpack.c.b16 %v537, %v535
    %v702 = vpack.c.b16 %v538, %v536
    %v703 = vpack.c.b16 %v541, %v539
    %v704 = vpack.c.b16 %v542, %v540
    %v705 = vpack.c.b16 %v545, %v543
    %v706 = vpack.c.b16 %v546, %v544
    %v707 = vpack.c.b16 %v549, %v547
    %v708 = vpack.c.b16 %v550, %v548
    %v709 = vpack.c.b16 %v553, %v551
    %v710 = vpack.c.b16 %v554, %v552
    %v711 = vpack.c.b16 %v557, %v555
    %v712 = vpack.c.b16 %v558, %v556
    %v713 = vpack.c.b16 %v561, %v559
    %v714 = vpack.c.b16 %v562, %v560
    %v715 = vpack.c.b16 %v565, %v563
    %v716 = vpack.c.b16 %v566, %v564
    %v717 = vpack.c.b16 %v569, %v567
    %v718 = vpack.c.b16 %v570, %v568
    %v719 = vpack.c.b16 %v573, %v571
    %v720 = vpack.c.b16 %v574, %v572
    %v721 = vpack.c.b16 %v577, %v575
    %v722 = vpack.c.b16 %v578, %v576
    %v723 = vpack.c.b16 %v581, %v579
    %v724 = vpack.c.b16 %v582, %v580
    %v725 = vpack.c.b16 %v585, %v583
    %v726 = vpack.c.b16 %v586, %v584
    %v727 = vpack.c.b16 %v589, %v587
    %v728 = vpack.c.b16 %v590, %v588
    %v729 = vpack.c.b16 %v593, %v591
    %v730 = vpack.c.b16 %v594, %v592
    %v731 = vpack.c.b16 %v597, %v595
    %v732 = vpack.c.b16 %v598, %v596
    %v733 = vpack.c.b16 %v601, %v599
    %v734 = vpack.c.b16 %v602, %v600
    %v735 = vpack.c.b16 %v605, %v603
    %v736 = vpack.c.b16 %v606, %v604
    %v737 = vpack.c.b16 %v609, %v607
    %v738 = vpack.c.b16 %v610, %v608
    %v739 = vpack.c.b16 %v613, %v611
    %v740 = vpack.c.b16 %v614, %v612
    %v741 = vpack.c.b16 %v617, %v615
    %v742 = vpack.c.b16 %v618, %v616
    %v743 = vpack.c.b16 %v621, %v619
    %v744 = vpack.c.b16 %v622, %v620
    %v745 = vpack.c.b16 %v625, %v623
    %v746 = vpack.c.b16 %v626, %v624
    %v747 = vpack.c.b16 %v629, %v627
    %v748 = vpack.c.b16 %v630, %v628
    %v749 = vpack.c.b16 %v633, %v631
    %v750 = vpack.c.b16 %v634, %v632
    %v751 = vpack.c.b16 %v637, %v635
    %v752 = vpack.c.b16 %v638, %v636
    %v753 = vpack.c.b16 %v641, %v639
    %v754 = vpack.c.b16 %v642, %v640
    %v755 = vpack.c.b16 %v645, %v643
    %v756 = vpack.c.b16 %v646, %v644
    %v757 = vpack.c.b16 %v649, %v647
    %v758 = vpack.c.b16 %v650, %v648
    %v759 = vpack.c.b16 %v653, %v651
    %v760 = vpack.c.b16 %v654, %v652
    %v761 = vpack.c.b16 %v657, %v655
    %v762 = vpack.c.b16 %v658, %v656
    %v763 = vpack.c.b16 %v661, %v659
    %v764 = vpack.c.b16 %v662, %v660
    %v765 = vpack.c.b16 %v665, %v663
    %v766 = vpack.c.b16 %v666, %v664
    %v767 = vpack.c.b16 %v669, %v667
    %v768 = vpack.c.b16 %v670, %v668
    %v769 = vpack.c.b16 %v673, %v671
    %v770 = vpack.c.b16 %v674, %v672
    %867 = vmatpush.bf16.msra.mxu0 %v689
    %868 = vmatpush.bf16.msra.mxu0 %v687
    %869 = vmatpush.bf16.msra.mxu0 %v685
    %870 = vmatpush.bf16.msra.mxu0 %v683
    %871 = vmatpush.bf16.msra.mxu0 %v681
    %872 = vmatpush.bf16.msra.mxu0 %v679
    %873 = vmatpush.bf16.msra.mxu0 %v677
    %874 = vmatpush.bf16.msra.mxu0 %v675
    %875 = vmatmul.bf16.gmra.mxu0 %v162
    %v876 = vpop.f32.mrf.mxu0
    %v877 = vadd.f32 %v371, %v876
    %v878 = vpop.f32.mrf.mxu0
    %879 = vdwg.mxu0
    %880 = vmatpush.bf16.msra.mxu0 %v705
    %881 = vmatpush.bf16.msra.mxu0 %v703
    %882 = vmatpush.bf16.msra.mxu0 %v701
    %883 = vmatpush.bf16.msra.mxu0 %v699
    %884 = vmatpush.bf16.msra.mxu0 %v697
    %885 = vmatpush.bf16.msra.mxu0 %v695
    %886 = vmatpush.bf16.msra.mxu0 %v693
    %887 = vmatpush.bf16.msra.mxu0 %v691
    %888 = vmatmul.bf16.gmra.mxu0 %v163
    %v889 = vpop.f32.mrf.mxu0
    %v890 = vadd.f32 %v877, %v889
    %v891 = vpop.f32.mrf.mxu0
    %892 = vdwg.mxu0
    %893 = vmatpush.bf16.msra.mxu0 %v721
    %894 = vmatpush.bf16.msra.mxu0 %v719
    %895 = vmatpush.bf16.msra.mxu0 %v717
    %896 = vmatpush.bf16.msra.mxu0 %v715
    %897 = vmatpush.bf16.msra.mxu0 %v713
    %898 = vmatpush.bf16.msra.mxu0 %v711
    %899 = vmatpush.bf16.msra.mxu0 %v709
    %900 = vmatpush.bf16.msra.mxu0 %v707
    %901 = vmatmul.bf16.gmra.mxu0 %v164
    %v902 = vpop.f32.mrf.mxu0
    %v903 = vadd.f32 %v890, %v902
    %v904 = vpop.f32.mrf.mxu0
    %905 = vdwg.mxu0
    %906 = vmatpush.bf16.msra.mxu0 %v737
    %907 = vmatpush.bf16.msra.mxu0 %v735
    %908 = vmatpush.bf16.msra.mxu0 %v733
    %909 = vmatpush.bf16.msra.mxu0 %v731
    %910 = vmatpush.bf16.msra.mxu0 %v729
    %911 = vmatpush.bf16.msra.mxu0 %v727
    %912 = vmatpush.bf16.msra.mxu0 %v725
    %913 = vmatpush.bf16.msra.mxu0 %v723
    %914 = vmatmul.bf16.gmra.mxu0 %v165
    %v915 = vpop.f32.mrf.mxu0
    %v916 = vadd.f32 %v903, %v915
    %v917 = vpop.f32.mrf.mxu0
    %918 = vdwg.mxu0
    %919 = vmatpush.bf16.msra.mxu0 %v753
    %920 = vmatpush.bf16.msra.mxu0 %v751
    %921 = vmatpush.bf16.msra.mxu0 %v749
    %922 = vmatpush.bf16.msra.mxu0 %v747
    %923 = vmatpush.bf16.msra.mxu0 %v745
    %924 = vmatpush.bf16.msra.mxu0 %v743
    %925 = vmatpush.bf16.msra.mxu0 %v741
    %926 = vmatpush.bf16.msra.mxu0 %v739
    %927 = vmatmul.bf16.gmra.mxu0 %v166
    %v928 = vpop.f32.mrf.mxu0
    %v929 = vadd.f32 %v916, %v928
    %v930 = vpop.f32.mrf.mxu0
    %931 = vdwg.mxu0
    %932 = vmatpush.bf16.msra.mxu0 %v769
    %933 = vmatpush.bf16.msra.mxu0 %v767
    %934 = vmatpush.bf16.msra.mxu0 %v765
    %935 = vmatpush.bf16.msra.mxu0 %v763
    %936 = vmatpush.bf16.msra.mxu0 %v761
    %937 = vmatpush.bf16.msra.mxu0 %v759
    %938 = vmatpush.bf16.msra.mxu0 %v757
    %939 = vmatpush.bf16.msra.mxu0 %v755
    %940 = vmatmul.bf16.gmra.mxu0 %v167
    %v941 = vpop.f32.mrf.mxu0
    %v942 = vadd.f32 %v929, %v941
    %v943 = vpop.f32.mrf.mxu0
    %944 = vdwg.mxu0
    %945 = vmatpush.bf16.msra.mxu0 %v690
    %946 = vmatpush.bf16.msra.mxu0 %v688
    %947 = vmatpush.bf16.msra.mxu0 %v686
    %948 = vmatpush.bf16.msra.mxu0 %v684
    %949 = vmatpush.bf16.msra.mxu0 %v682
    %950 = vmatpush.bf16.msra.mxu0 %v680
    %951 = vmatpush.bf16.msra.mxu0 %v678
    %952 = vmatpush.bf16.msra.mxu0 %v676
    %953 = vmatmul.bf16.gmra.mxu0 %v162
    %v954 = vpop.f32.mrf.mxu0
    %v955 = vadd.f32 %v384, %v954
    %v956 = vpop.f32.mrf.mxu0
    %957 = vdwg.mxu0
    %958 = vmatpush.bf16.msra.mxu0 %v706
    %959 = vmatpush.bf16.msra.mxu0 %v704
    %960 = vmatpush.bf16.msra.mxu0 %v702
    %961 = vmatpush.bf16.msra.mxu0 %v700
    %962 = vmatpush.bf16.msra.mxu0 %v698
    %963 = vmatpush.bf16.msra.mxu0 %v696
    %964 = vmatpush.bf16.msra.mxu0 %v694
    %965 = vmatpush.bf16.msra.mxu0 %v692
    %966 = vmatmul.bf16.gmra.mxu0 %v163
    %v967 = vpop.f32.mrf.mxu0
    %v968 = vadd.f32 %v955, %v967
    %v969 = vpop.f32.mrf.mxu0
    %970 = vdwg.mxu0
    %971 = vmatpush.bf16.msra.mxu0 %v722
    %972 = vmatpush.bf16.msra.mxu0 %v720
    %973 = vmatpush.bf16.msra.mxu0 %v718
    %974 = vmatpush.bf16.msra.mxu0 %v716
    %975 = vmatpush.bf16.msra.mxu0 %v714
    %976 = vmatpush.bf16.msra.mxu0 %v712
    %977 = vmatpush.bf16.msra.mxu0 %v710
    %978 = vmatpush.bf16.msra.mxu0 %v708
    %979 = vmatmul.bf16.gmra.mxu0 %v164
    %v980 = vpop.f32.mrf.mxu0
    %v981 = vadd.f32 %v968, %v980
    %v982 = vpop.f32.mrf.mxu0
    %983 = vdwg.mxu0
    %984 = vmatpush.bf16.msra.mxu0 %v738
    %985 = vmatpush.bf16.msra.mxu0 %v736
    %986 = vmatpush.bf16.msra.mxu0 %v734
    %987 = vmatpush.bf16.msra.mxu0 %v732
    %988 = vmatpush.bf16.msra.mxu0 %v730
    %989 = vmatpush.bf16.msra.mxu0 %v728
    %990 = vmatpush.bf16.msra.mxu0 %v726
    %991 = vmatpush.bf16.msra.mxu0 %v724
    %992 = vmatmul.bf16.gmra.mxu0 %v165
    %v993 = vpop.f32.mrf.mxu0
    %v994 = vadd.f32 %v981, %v993
    %v995 = vpop.f32.mrf.mxu0
    %996 = vdwg.mxu0
    %997 = vmatpush.bf16.msra.mxu0 %v754
    %998 = vmatpush.bf16.msra.mxu0 %v752
    %999 = vmatpush.bf16.msra.mxu0 %v750
    %1000 = vmatpush.bf16.msra.mxu0 %v748
    %1001 = vmatpush.bf16.msra.mxu0 %v746
    %1002 = vmatpush.bf16.msra.mxu0 %v744
    %1003 = vmatpush.bf16.msra.mxu0 %v742
    %1004 = vmatpush.bf16.msra.mxu0 %v740
    %1005 = vmatmul.bf16.gmra.mxu0 %v166
    %v1006 = vpop.f32.mrf.mxu0
    %v1007 = vadd.f32 %v994, %v1006
    %v1008 = vpop.f32.mrf.mxu0
    %1009 = vdwg.mxu0
    %1010 = vmatpush.bf16.msra.mxu0 %v770
    %1011 = vmatpush.bf16.msra.mxu0 %v768
    %1012 = vmatpush.bf16.msra.mxu0 %v766
    %1013 = vmatpush.bf16.msra.mxu0 %v764
    %1014 = vmatpush.bf16.msra.mxu0 %v762
    %1015 = vmatpush.bf16.msra.mxu0 %v760
    %1016 = vmatpush.bf16.msra.mxu0 %v758
    %1017 = vmatpush.bf16.msra.mxu0 %v756
    %1018 = vmatmul.bf16.gmra.mxu0 %v167
    %v1019 = vpop.f32.mrf.mxu0
    %v1020 = vadd.f32 %v1007, %v1019
    %v1021 = vpop.f32.mrf.mxu0
    %1022 = vdwg.mxu0
    %v1023 = vld [vmem:[%s6] sm:$0x3]
    %v1025 = vperm.slane %v1023, 0
    %v1026 = vperm.slane %v1023, 1
    %v1029 = vadd.f32 %v942, %v1025
    %v1030 = vadd.f32 %v1020, %v1026
    %v1031 = vmax.f32 %v1029, 0.0
    %v1032 = vmax.f32 %v1030, 0.0
    %v1033 = vpack.c.bf16 %v1031, %v1031
    %v1034 = vpack.c.bf16 %v1032, %v1032
    %v1035 = vld [vmem:[#allocation11] sm:$0xf]
    %v1036 = vld [vmem:[#allocation11 + $0x4] sm:$0xf]
    %v1037 = vld [vmem:[#allocation11 + $0x8] sm:$0xf]
    %v1038 = vld [vmem:[#allocation11 + $0xc] sm:$0xf]
    %v1039 = vld [vmem:[#allocation11 + $0x10] sm:$0xf]
    %v1040 = vld [vmem:[#allocation11 + $0x14] sm:$0xf]
    %v1041 = vld [vmem:[#allocation11 + $0x18] sm:$0xf]
    %v1042 = vld [vmem:[#allocation11 + $0x1c] sm:$0xf]
    %v1043 = vld [vmem:[#allocation11 + $0x20] sm:$0xf]
    %v1044 = vld [vmem:[#allocation11 + $0x24] sm:$0xf]
    %v1045 = vld [vmem:[#allocation11 + $0x28] sm:$0xf]
    %v1046 = vld [vmem:[#allocation11 + $0x2c] sm:$0xf]
    %v1047 = vld [vmem:[#allocation11 + $0x30] sm:$0xf]
    %v1048 = vld [vmem:[#allocation11 + $0x34] sm:$0xf]
    %v1049 = vld [vmem:[#allocation11 + $0x38] sm:$0xf]
    %v1050 = vld [vmem:[#allocation11 + $0x3c] sm:$0xf]
    %v1051 = vld [vmem:[#allocation11 + $0x40] sm:$0xf]
    %v1052 = vld [vmem:[#allocation11 + $0x44] sm:$0xf]
    %v1053 = vld [vmem:[#allocation11 + $0x48] sm:$0xf]
    %v1054 = vld [vmem:[#allocation11 + $0x4c] sm:$0xf]
    %v1055 = vld [vmem:[#allocation11 + $0x50] sm:$0xf]
    %v1056 = vld [vmem:[#allocation11 + $0x54] sm:$0xf]
    %v1057 = vld [vmem:[#allocation11 + $0x58] sm:$0xf]
    %v1058 = vld [vmem:[#allocation11 + $0x5c] sm:$0xf]
    %v1059 = vld [vmem:[#allocation11 + $0x60] sm:$0xf]
    %v1060 = vld [vmem:[#allocation11 + $0x64] sm:$0xf]
    %v1061 = vld [vmem:[#allocation11 + $0x68] sm:$0xf]
    %v1062 = vld [vmem:[#allocation11 + $0x6c] sm:$0xf]
    %v1063 = vld [vmem:[#allocation11 + $0x70] sm:$0xf]
    %v1064 = vld [vmem:[#allocation11 + $0x74] sm:$0xf]
    %v1065 = vld [vmem:[#allocation11 + $0x78] sm:$0xf]
    %v1066 = vld [vmem:[#allocation11 + $0x7c] sm:$0xf]
    %v1067 = vld [vmem:[%s8] sm:$0x1]
    %v1069 = vperm.slane %v1067, 0
    %v1103 = vunpack.c.l.b16 %v1035
    %v1104 = vunpack.c.l.b16 %v1036
    %v1105 = vunpack.c.l.b16 %v1037
    %v1106 = vunpack.c.l.b16 %v1038
    %v1107 = vunpack.c.l.b16 %v1039
    %v1108 = vunpack.c.l.b16 %v1040
    %v1109 = vunpack.c.l.b16 %v1041
    %v1110 = vunpack.c.l.b16 %v1042
    %v1111 = vunpack.c.l.b16 %v1043
    %v1112 = vunpack.c.l.b16 %v1044
    %v1113 = vunpack.c.l.b16 %v1045
    %v1114 = vunpack.c.l.b16 %v1046
    %v1115 = vunpack.c.l.b16 %v1047
    %v1116 = vunpack.c.l.b16 %v1048
    %v1117 = vunpack.c.l.b16 %v1049
    %v1118 = vunpack.c.l.b16 %v1050
    %v1119 = vunpack.c.l.b16 %v1051
    %v1120 = vunpack.c.l.b16 %v1052
    %v1121 = vunpack.c.l.b16 %v1053
    %v1122 = vunpack.c.l.b16 %v1054
    %v1123 = vunpack.c.l.b16 %v1055
    %v1124 = vunpack.c.l.b16 %v1056
    %v1125 = vunpack.c.l.b16 %v1057
    %v1126 = vunpack.c.l.b16 %v1058
    %v1127 = vunpack.c.l.b16 %v1059
    %v1128 = vunpack.c.l.b16 %v1060
    %v1129 = vunpack.c.l.b16 %v1061
    %v1130 = vunpack.c.l.b16 %v1062
    %v1131 = vunpack.c.l.b16 %v1063
    %v1132 = vunpack.c.l.b16 %v1064
    %v1133 = vunpack.c.l.b16 %v1065
    %v1134 = vunpack.c.l.b16 %v1066
    %v1135 = vpack.c.b16 %v1104, %v1103
    %v1136 = vpack.c.b16 %v1106, %v1105
    %v1137 = vpack.c.b16 %v1108, %v1107
    %v1138 = vpack.c.b16 %v1110, %v1109
    %v1139 = vpack.c.b16 %v1112, %v1111
    %v1140 = vpack.c.b16 %v1114, %v1113
    %v1141 = vpack.c.b16 %v1116, %v1115
    %v1142 = vpack.c.b16 %v1118, %v1117
    %v1143 = vpack.c.b16 %v1120, %v1119
    %v1144 = vpack.c.b16 %v1122, %v1121
    %v1145 = vpack.c.b16 %v1124, %v1123
    %v1146 = vpack.c.b16 %v1126, %v1125
    %v1147 = vpack.c.b16 %v1128, %v1127
    %v1148 = vpack.c.b16 %v1130, %v1129
    %v1149 = vpack.c.b16 %v1132, %v1131
    %v1150 = vpack.c.b16 %v1134, %v1133
    %1167 = vmatpush.bf16.msra.mxu0 %v1142
    %1168 = vmatpush.bf16.msra.mxu0 %v1141
    %1169 = vmatpush.bf16.msra.mxu0 %v1140
    %1170 = vmatpush.bf16.msra.mxu0 %v1139
    %1171 = vmatpush.bf16.msra.mxu0 %v1138
    %1172 = vmatpush.bf16.msra.mxu0 %v1137
    %1173 = vmatpush.bf16.msra.mxu0 %v1136
    %1174 = vmatpush.bf16.msra.mxu0 %v1135
    %1175 = vmatmul.bf16.gmra.mxu0 %v1033
    %v1176 = vpop.f32.mrf.mxu0
    %v1177 = vadd.f32 %v1069, %v1176
    %v1178 = vpop.f32.mrf.mxu0
    %1179 = vdwg.mxu0
    %1180 = vmatpush.bf16.msra.mxu0 %v1150
    %1181 = vmatpush.bf16.msra.mxu0 %v1149
    %1182 = vmatpush.bf16.msra.mxu0 %v1148
    %1183 = vmatpush.bf16.msra.mxu0 %v1147
    %1184 = vmatpush.bf16.msra.mxu0 %v1146
    %1185 = vmatpush.bf16.msra.mxu0 %v1145
    %1186 = vmatpush.bf16.msra.mxu0 %v1144
    %1187 = vmatpush.bf16.msra.mxu0 %v1143
    %1188 = vmatmul.bf16.gmra.mxu0 %v1034
    %v1189 = vpop.f32.mrf.mxu0
    %v1190 = vadd.f32 %v1177, %v1189
    %v1191 = vpop.f32.mrf.mxu0
    %1192 = vdwg.mxu0
    %v1193 = vpack.c.bf16 %v1190, %v1190
    %1194 = vst [vmem:[#allocation13] sm:$0xf] %v1193
    // Predicated region
    $region62: #{tpu_custom_call.1} parent=1 // pred_check
      _
    $region63: #{tpu_custom_call.1} parent=1 // pred_check_branch
      %1196 = sbr.rel (0) target = $region65
    $region64: #{tpu_custom_call.1} parent=1 // pred_region
      %1198 = vsyncadd [#allocation4], 0
      %s1200 = sshll.u32 [#allocation13], 4
      %s1201 = int_to_ptr.vmem [resolvable:$true] %s1200
      %s1202 = sshll.u32 %s9, 4
      %s1203 = int_to_ptr.hbm [resolvable:$true] %s1202
      %1205 = dma.vmem_to_hbm [thread:$0]  %s1201, 64, %s1203, [#allocation4]
    $region65: #{tpu_custom_call.1} parent=1 // pred_fallthru
      _
    // Predicated region
    $region66: #{tpu_custom_call.1} parent=1 // pred_check
      _
    $region67: #{tpu_custom_call.1} parent=1 // pred_check_branch
      %1207 = sbr.rel (0) target = $region69
    $region68: #{tpu_custom_call.1} parent=1 // pred_region
      %1209 = dma.done [#allocation4], 64
    $region69: #{tpu_custom_call.1} parent=1 // pred_fallthru
      _
    %1210 = vsyncpa [#allocation3], 1
    %1211 = vsyncpa [#allocation6], 1
    %1212 = vsyncpa [#allocation9], 1
    %1213 = vsyncpa [#allocation12], 1
    %1214 = vsyncpa [#allocation4], 1

</llo_original>
